<compile_context>
chip_gen: v5e
topology: v5e:2x2
jax: 0.10.0
libtpu: 0.0.40
codegen_flags: <defaults>
</compile_context>

<pallas_src>
import functools

import jax
import jax.numpy as jnp
from jax.experimental import pallas as pl
from jax.experimental.pallas import tpu as pltpu

HIDDEN = 64
LANES = 128


def mlp_kernel(x_ref, w1_ref, b1_ref, w2_ref, b2_ref, w3_ref, b3_ref, o_ref,
               *, compute_dtype):
    cdt = compute_dtype
    # x_ref: (1, bm) -- batch on lanes (lane-dense).
    x_row = x_ref[...].astype(cdt)

    # Layer 1: Linear(1, 64) == outer product; VPU broadcast mul-add (avoid a degenerate
    # K=1 MXU matmul).  (64,1) * (1,bm) + (64,1) -> (64,bm) in compute dtype.
    h1 = jnp.tanh(w1_ref[...] * x_row + b1_ref[...])

    # Layer 2: Linear(64, 64) -- the only real MXU pass.  w2 arrives pre-cast to bf16;
    # accumulation stays f32.  (On the bf16 path h1 is already bf16, so the astype is a no-op.)
    z2 = jnp.dot(w2_ref[...], h1.astype(jnp.bfloat16),
                 preferred_element_type=jnp.float32) + b2_ref[...]
    h2 = jnp.tanh(z2.astype(cdt))  # (64, bm) -- tanh on EUP in compute dtype

    # Layer 3: Linear(64, 1) == weighted reduce over the 64 features; multiply/reduce in f32
    # (f32 w3 * bf16 h2 promotes to f32).  -> (1, bm)
    out = jnp.sum(w3_ref[...] * h2, axis=0, keepdims=True) + b3_ref[...]
    o_ref[...] = out.astype(o_ref.dtype)


def _device_kind():
    try:
        return jax.devices()[0].device_kind.lower()
    except Exception:
        return ""


def net_forward(x, params, *, bm=4096):
    """x: (N, 1) float32. params: dict of w1,b1,w2,b2,w3,b3 (f32, PyTorch orientation).
    Returns (N, 1) float32."""
    kind = _device_kind()
    is_v7 = "v7" in kind
    # bf16 VPU/EUP exist on v6e/v7x; v5e has no bf16 elementwise path -> keep f32 there.
    use_bf16_elementwise = ("v6" in kind) or is_v7
    cdt = jnp.bfloat16 if use_bf16_elementwise else jnp.float32

    w1, b1, w2, b2, w3, b3 = (params["w1"], params["b1"], params["w2"],
                              params["b2"], params["w3"], params["b3"])
    # Hoist casts out of the kernel (weights are grid-resident).
    w1c = w1.astype(cdt)
    b1c = b1.astype(cdt)
    w2c = w2.astype(jnp.bfloat16)  # MXU operand; b2/w3/b3 stay f32 (f32 accum / f32 reduce)

    N = x.shape[0]

    # Batch tile: multiple of 128 (lane width), large enough to amortize the per-grid-step
    # overhead; cap at 8192 so the (64,bm) intermediates stay under the 16 MiB scoped-VMEM
    # default on v5e (and well under v7x's 32 MiB scoped / 64 MiB physical).
    bm = max(LANES, min(bm, 8192))
    Np128 = pl.cdiv(N, LANES) * LANES
    bm_eff = min(bm, Np128)
    # v7x has 2 TensorCores per chip: keep grid >= 2 steps when there is enough work so the
    # core-parallel split gives both TCs a share of the batch axis.
    if is_v7 and Np128 >= 2 * LANES:
        bm_eff = min(bm_eff, max(LANES, (Np128 // (2 * LANES)) * LANES))
    bm_eff = max(LANES, (bm_eff // LANES) * LANES)
    Np = pl.cdiv(N, bm_eff) * bm_eff
    grid = (Np // bm_eff,)

    # Transposed, lane-dense layout: batch on lanes.  Pad ragged N with zeros (sliced off below).
    x_row = jnp.pad(x.reshape(1, N), ((0, 0), (0, Np - N)))

    # Weights/biases as whole-array blocks (block_shape == full shape satisfies the (8,128) rule).
    full = lambda arr: pl.BlockSpec(arr.shape, lambda i: (0,) * arr.ndim)

    batch_sem = pltpu.CORE_PARALLEL if is_v7 else pltpu.PARALLEL

    hid = w2.shape[0]
    param_bytes = sum(int(a.size) * a.dtype.itemsize
                      for a in (w1c, b1c, w2c, b2, w3, b3))
    cost = pl.CostEstimate(
        flops=2 * Np * (hid + hid * hid + hid),
        transcendentals=2 * Np * hid,
        bytes_accessed=8 * Np + param_bytes,
    )

    out_row = pl.pallas_call(
        functools.partial(mlp_kernel, compute_dtype=cdt),
        out_shape=jax.ShapeDtypeStruct((1, Np), x.dtype),
        grid_spec=pltpu.PrefetchScalarGridSpec(
            num_scalar_prefetch=0,
            grid=grid,
            in_specs=[
                pl.BlockSpec((1, bm_eff), lambda i: (0, i)),  # x: lane-dense batch tile
                full(w1c), full(b1c),
                full(w2c), full(b2),
                full(w3), full(b3),
            ],
            out_specs=pl.BlockSpec((1, bm_eff), lambda i: (0, i)),  # lane-dense output
        ),
        compiler_params=pltpu.CompilerParams(
            dimension_semantics=(batch_sem,),
        ),
        cost_estimate=cost,
    )(x_row, w1c, b1c, w2c, b2, w3, b3)

    return out_row[:, :N].reshape(N, 1)


def init_params(key, hidden=HIDDEN):
    """Deterministic synthetic parameters.

    Shapes match PyTorch nn.Linear (out_features, in_features); biases stored as
    (out_features, 1) columns so they broadcast over the lane (batch) axis in the kernel.
    """
    k1, k2, k3, k4, k5, k6 = jax.random.split(key, 6)
    w1 = jax.random.normal(k1, (hidden, 1), jnp.float32) * 0.5                    # Linear(1, 64).weight
    b1 = jax.random.normal(k2, (hidden, 1), jnp.float32) * 0.1                    # Linear(1, 64).bias
    w2 = jax.random.normal(k3, (hidden, hidden), jnp.float32) / jnp.sqrt(hidden)  # Linear(64, 64).weight
    b2 = jax.random.normal(k4, (hidden, 1), jnp.float32) * 0.1                    # Linear(64, 64).bias
    w3 = jax.random.normal(k5, (hidden, 1), jnp.float32) / jnp.sqrt(hidden)       # Linear(64, 1).weight.T
    b3 = jax.random.normal(k6, (1, 1), jnp.float32) * 0.1                         # Linear(64, 1).bias
    return {"w1": w1, "b1": b1, "w2": w2, "b2": b2, "w3": w3, "b3": b3}


def net_forward_ref(x, p):
    """Pure-JAX f32 reference in the PyTorch convention (y = x @ W.T + b)."""
    h1 = jnp.tanh(x @ p["w1"].T + p["b1"].T)   # (N, 64)
    h2 = jnp.tanh(h1 @ p["w2"].T + p["b2"].T)  # (N, 64)
    return h2 @ p["w3"] + p["b3"]              # (N, 1)


if __name__ == "__main__":
    key = jax.random.PRNGKey(0)
    kx, kx2, kp = jax.random.split(key, 3)

    params = init_params(kp, hidden=HIDDEN)

    # Small batch (single padded tile, grid = 1).
    N = 8
    x = jax.random.normal(kx, (N, 1), jnp.float32)
    out = jax.block_until_ready(net_forward(x, params))
    ref = net_forward_ref(x, params)
    assert out.shape == (N, 1), out.shape
    # bf16 MXU operands (and bf16 tanh on v6e/v7x) with f32 accumulation -> small drift allowed.
    assert jnp.allclose(out, ref, atol=5e-2, rtol=5e-2), "mismatch vs reference (small batch)"

    # Ragged, multi-tile batch (exercises padding + multi-step grid).
    N2 = 600
    x2 = jax.random.normal(kx2, (N2, 1), jnp.float32)
    out2 = jax.block_until_ready(net_forward(x2, params, bm=256))
    ref2 = net_forward_ref(x2, params)
    assert out2.shape == (N2, 1), out2.shape
    assert jnp.allclose(out2, ref2, atol=5e-2, rtol=5e-2), "mismatch vs reference (multi-tile)"

    print("KERNEL_OK")
</pallas_src>

<mosaic_0001>
module attributes {stable_mosaic.version = 11 : i64} {
  func.func @mlp_kernel(%arg0: i32, %arg1: memref<1x128xf32, #tpu.memory_space<vmem>>, %arg2: memref<64x1xf32, #tpu.memory_space<vmem>>, %arg3: memref<64x1xf32, #tpu.memory_space<vmem>>, %arg4: memref<64x64xbf16, #tpu.memory_space<vmem>>, %arg5: memref<64x1xf32, #tpu.memory_space<vmem>>, %arg6: memref<64x1xf32, #tpu.memory_space<vmem>>, %arg7: memref<1x1xf32, #tpu.memory_space<vmem>>, %arg8: memref<1x128xf32, #tpu.memory_space<vmem>>) attributes {dimension_semantics = [#tpu.dimension_semantics<parallel>], iteration_bounds = array<i64: 1>, scalar_prefetch = 0 : i64, scratch_operands = 0 : i64, tpu.core_type = #tpu.core_type<tc>, window_params = [{transform_indices = @transform_0, window_bounds = array<i64: 1, 128>}, {pipeline_mode = #tpu.pipeline_mode<synchronous>, transform_indices = @transform_1, window_bounds = array<i64: 64, 1>}, {pipeline_mode = #tpu.pipeline_mode<synchronous>, transform_indices = @transform_2, window_bounds = array<i64: 64, 1>}, {pipeline_mode = #tpu.pipeline_mode<synchronous>, transform_indices = @transform_3, window_bounds = array<i64: 64, 64>}, {pipeline_mode = #tpu.pipeline_mode<synchronous>, transform_indices = @transform_4, window_bounds = array<i64: 64, 1>}, {pipeline_mode = #tpu.pipeline_mode<synchronous>, transform_indices = @transform_5, window_bounds = array<i64: 64, 1>}, {pipeline_mode = #tpu.pipeline_mode<synchronous>, transform_indices = @transform_6, window_bounds = array<i64: 1, 1>}, {transform_indices = @transform_7, window_bounds = array<i64: 1, 128>}]} {
    %c0 = arith.constant 0 : index
    %c0_0 = arith.constant 0 : index
    %0 = vector.load %arg1[%c0, %c0_0] : memref<1x128xf32, #tpu.memory_space<vmem>>, vector<1x128xf32>
    %c0_1 = arith.constant 0 : index
    %c0_2 = arith.constant 0 : index
    %1 = vector.load %arg2[%c0_1, %c0_2] : memref<64x1xf32, #tpu.memory_space<vmem>>, vector<64x1xf32>
    %2 = vector.broadcast %1 : vector<64x1xf32> to vector<64x128xf32>
    %3 = vector.broadcast %0 : vector<1x128xf32> to vector<64x128xf32>
    %4 = arith.mulf %2, %3 : vector<64x128xf32>
    %c0_3 = arith.constant 0 : index
    %c0_4 = arith.constant 0 : index
    %5 = vector.load %arg3[%c0_3, %c0_4] : memref<64x1xf32, #tpu.memory_space<vmem>>, vector<64x1xf32>
    %6 = vector.broadcast %5 : vector<64x1xf32> to vector<64x128xf32>
    %7 = arith.addf %4, %6 : vector<64x128xf32>
    %8 = math.tanh %7 : vector<64x128xf32>
    %c0_5 = arith.constant 0 : index
    %c0_6 = arith.constant 0 : index
    %9 = vector.load %arg4[%c0_5, %c0_6] : memref<64x64xbf16, #tpu.memory_space<vmem>>, vector<64x64xbf16>
    %10 = arith.truncf %8 : vector<64x128xf32> to vector<64x128xbf16>
    %cst = arith.constant dense<0.000000e+00> : vector<64x128xf32>
    %11 = tpu.matmul %9, %10, %cst {dimension_numbers = #tpu.dot_dimension_numbers<[1], [0], [0], [1], [0, 0, 1, 1], [], []>} : vector<64x64xbf16>, vector<64x128xbf16>, vector<64x128xf32> -> vector<64x128xf32>
    %c0_7 = arith.constant 0 : index
    %c0_8 = arith.constant 0 : index
    %12 = vector.load %arg5[%c0_7, %c0_8] : memref<64x1xf32, #tpu.memory_space<vmem>>, vector<64x1xf32>
    %13 = vector.broadcast %12 : vector<64x1xf32> to vector<64x128xf32>
    %14 = arith.addf %11, %13 : vector<64x128xf32>
    %15 = math.tanh %14 : vector<64x128xf32>
    %c0_9 = arith.constant 0 : index
    %c0_10 = arith.constant 0 : index
    %16 = vector.load %arg6[%c0_9, %c0_10] : memref<64x1xf32, #tpu.memory_space<vmem>>, vector<64x1xf32>
    %17 = vector.broadcast %16 : vector<64x1xf32> to vector<64x128xf32>
    %18 = arith.mulf %17, %15 : vector<64x128xf32>
    %cst_11 = arith.constant dense<0.000000e+00> : vector<128xf32>
    %19 = vector.multi_reduction <add>, %18, %cst_11 [0] : vector<64x128xf32> to vector<128xf32>
    %20 = vector.shape_cast %19 : vector<128xf32> to vector<1x128xf32>
    %c0_12 = arith.constant 0 : index
    %c0_13 = arith.constant 0 : index
    %21 = vector.load %arg7[%c0_12, %c0_13] : memref<1x1xf32, #tpu.memory_space<vmem>>, vector<1x1xf32>
    %22 = vector.broadcast %21 : vector<1x1xf32> to vector<1x128xf32>
    %23 = arith.addf %20, %22 : vector<1x128xf32>
    %c0_14 = arith.constant 0 : index
    %c0_15 = arith.constant 0 : index
    %24 = vector.load %arg8[%c0_14, %c0_15] : memref<1x128xf32, #tpu.memory_space<vmem>>, vector<1x128xf32>
    tpu.vector_store %arg8[%c0_14, %c0_15], %23 {strides = array<i32>} : memref<1x128xf32, #tpu.memory_space<vmem>>, vector<1x128xf32>,
    return
  }
  func.func @transform_0(%arg0: i32) -> (i32, i32) {
    %c0_i32 = arith.constant 0 : i32
    %c0_i32_0 = arith.constant 0 : i32
    return %c0_i32, %arg0 : i32, i32
  }
  func.func @transform_1(%arg0: i32) -> (i32, i32) {
    %c0_i32 = arith.constant 0 : i32
    %c0_i32_0 = arith.constant 0 : i32
    %c0_i32_1 = arith.constant 0 : i32
    return %c0_i32, %c0_i32_0 : i32, i32
  }
  func.func @transform_2(%arg0: i32) -> (i32, i32) {
    %c0_i32 = arith.constant 0 : i32
    %c0_i32_0 = arith.constant 0 : i32
    %c0_i32_1 = arith.constant 0 : i32
    return %c0_i32, %c0_i32_0 : i32, i32
  }
  func.func @transform_3(%arg0: i32) -> (i32, i32) {
    %c0_i32 = arith.constant 0 : i32
    %c0_i32_0 = arith.constant 0 : i32
    %c0_i32_1 = arith.constant 0 : i32
    return %c0_i32, %c0_i32_0 : i32, i32
  }
  func.func @transform_4(%arg0: i32) -> (i32, i32) {
    %c0_i32 = arith.constant 0 : i32
    %c0_i32_0 = arith.constant 0 : i32
    %c0_i32_1 = arith.constant 0 : i32
    return %c0_i32, %c0_i32_0 : i32, i32
  }
  func.func @transform_5(%arg0: i32) -> (i32, i32) {
    %c0_i32 = arith.constant 0 : i32
    %c0_i32_0 = arith.constant 0 : i32
    %c0_i32_1 = arith.constant 0 : i32
    return %c0_i32, %c0_i32_0 : i32, i32
  }
  func.func @transform_6(%arg0: i32) -> (i32, i32) {
    %c0_i32 = arith.constant 0 : i32
    %c0_i32_0 = arith.constant 0 : i32
    %c0_i32_1 = arith.constant 0 : i32
    return %c0_i32, %c0_i32_0 : i32, i32
  }
  func.func @transform_7(%arg0: i32) -> (i32, i32) {
    %c0_i32 = arith.constant 0 : i32
    %c0_i32_0 = arith.constant 0 : i32
    return %c0_i32, %arg0 : i32, i32
  }
}

</mosaic_0001>

<llo_original>
// kernel: tpu_custom_call.1
$region0: #{tpu_custom_call.1}
  #allocation0 [shape = 'u32[]', space=smem, size = 0x4, offset = 0x4, fixed_abs, tag = 'smem constant byte address 0x4 - core index']
  #allocation1 [shape = 'u32[72,128]{1,0:T(1,128)}', space=vmem, size = 0x9000, scoped, tag = 'internal scratch']
  #allocation2 [shape = 'f32[1,1]{1,0:T(1,128)S(1)}', space=vmem, size = 0x200, scoped, tag = 'scoped memory for tpu_custom_call.1']
  %s0 = inlined_call_operand.vmem [shape: f32[1,128], index: 0, kind: input, shape index: {}]
  %s1 = inlined_call_operand.vmem [shape: f32[64,1], index: 1, kind: input, shape index: {}]
  %s2 = inlined_call_operand.vmem [shape: f32[64,1], index: 2, kind: input, shape index: {}]
  %s3 = inlined_call_operand.vmem [shape: bf16[64,64], index: 3, kind: input, shape index: {}]
  %s4 = inlined_call_operand.vmem [shape: f32[64,1], index: 4, kind: input, shape index: {}]
  %s5 = inlined_call_operand.vmem [shape: f32[64,1], index: 5, kind: input, shape index: {}]
  %s6 = inlined_call_operand.<no memory space> [shape: f32[1,1], index: 6, kind: input, shape index: {}]
  %s7 = inlined_call_operand.hbm [shape: f32[1,128], index: 7, kind: output, shape index: {}]
  %s8 = sld [smem:[#allocation0]]
  $region38: #{tpu_custom_call.1} parent=0
    _
  %s10 = ssub.s32 1, %s8
  %s11 = scalar_select 0, %s10, %s8
  %v12 = vstv %s6
  %13 = vst [vmem:[#allocation2] sm:$0x1] %v12
  $region1: #{tpu_custom_call.1} parent=0
    #allocation3 [shape = 'u8[512]{0}', space=vmem, size = 0x400, scoped, tag = 'output window, operand 0, single buffered']
    #allocation4 [shape = 's32[1]{0}', space=sflag, size = 0x4, scoped, tag = 'scoped memory for tpu_custom_call.1']
    %14 = vsyncpa [#allocation4], 0
    // Predicated region
    $region2: #{tpu_custom_call.1} parent=1 // pred_check
      _
    $region3: #{tpu_custom_call.1} parent=1 // pred_check_branch
      %16 = sbr.rel (0) target = $region5
    $region4: #{tpu_custom_call.1} parent=1 // pred_region
      _
    $region5: #{tpu_custom_call.1} parent=1 // pred_fallthru
      _
    // Predicated region
    $region6: #{tpu_custom_call.1} parent=1 // pred_check
      _
    $region7: #{tpu_custom_call.1} parent=1 // pred_check_branch
      %18 = sbr.rel (0) target = $region9
    $region8: #{tpu_custom_call.1} parent=1 // pred_region
      _
    $region9: #{tpu_custom_call.1} parent=1 // pred_fallthru
      _
    // Predicated region
    $region10: #{tpu_custom_call.1} parent=1 // pred_check
      _
    $region11: #{tpu_custom_call.1} parent=1 // pred_check_branch
      %20 = sbr.rel (0) target = $region13
    $region12: #{tpu_custom_call.1} parent=1 // pred_region
      _
    $region13: #{tpu_custom_call.1} parent=1 // pred_fallthru
      _
    // Predicated region
    $region14: #{tpu_custom_call.1} parent=1 // pred_check
      _
    $region15: #{tpu_custom_call.1} parent=1 // pred_check_branch
      %22 = sbr.rel (0) target = $region17
    $region16: #{tpu_custom_call.1} parent=1 // pred_region
      _
    $region17: #{tpu_custom_call.1} parent=1 // pred_fallthru
      _
    // Predicated region
    $region18: #{tpu_custom_call.1} parent=1 // pred_check
      _
    $region19: #{tpu_custom_call.1} parent=1 // pred_check_branch
      %24 = sbr.rel (0) target = $region21
    $region20: #{tpu_custom_call.1} parent=1 // pred_region
      _
    $region21: #{tpu_custom_call.1} parent=1 // pred_fallthru
      _
    // Predicated region
    $region22: #{tpu_custom_call.1} parent=1 // pred_check
      _
    $region23: #{tpu_custom_call.1} parent=1 // pred_check_branch
      %26 = sbr.rel (0) target = $region25
    $region24: #{tpu_custom_call.1} parent=1 // pred_region
      _
    $region25: #{tpu_custom_call.1} parent=1 // pred_fallthru
      _
    // Predicated region
    $region26: #{tpu_custom_call.1} parent=1 // pred_check
      _
    $region27: #{tpu_custom_call.1} parent=1 // pred_check_branch
      %28 = sbr.rel (0) target = $region29
    $region28: #{tpu_custom_call.1} parent=1 // pred_region
      _
    $region29: #{tpu_custom_call.1} parent=1 // pred_fallthru
      _
    %v30 = vld [vmem:[%s0] sm:$0x1]
    %v31 = vld [vmem:[%s1] sm:$0xff]
    %v32 = vld [vmem:[%s1 + $0x8] sm:$0xff]
    %v33 = vld [vmem:[%s1 + $0x10] sm:$0xff]
    %v34 = vld [vmem:[%s1 + $0x18] sm:$0xff]
    %v35 = vld [vmem:[%s1 + $0x20] sm:$0xff]
    %v36 = vld [vmem:[%s1 + $0x28] sm:$0xff]
    %v37 = vld [vmem:[%s1 + $0x30] sm:$0xff]
    %v38 = vld [vmem:[%s1 + $0x38] sm:$0xff]
    %40 = vset.pattern.permute.xlu0 0
    %41 = vperm.xlu0 %40, %v31
    %v42 = vpop.permute.xlu0 %41
    %45 = vset.pattern.permute.xlu0 0
    %46 = vperm.xlu0 %45, %v32
    %v47 = vpop.permute.xlu0 %46
    %50 = vset.pattern.permute.xlu0 0
    %51 = vperm.xlu0 %50, %v33
    %v52 = vpop.permute.xlu0 %51
    %55 = vset.pattern.permute.xlu0 0
    %56 = vperm.xlu0 %55, %v34
    %v57 = vpop.permute.xlu0 %56
    %60 = vset.pattern.permute.xlu0 0
    %61 = vperm.xlu0 %60, %v35
    %v62 = vpop.permute.xlu0 %61
    %65 = vset.pattern.permute.xlu0 0
    %66 = vperm.xlu0 %65, %v36
    %v67 = vpop.permute.xlu0 %66
    %70 = vset.pattern.permute.xlu0 0
    %71 = vperm.xlu0 %70, %v37
    %v72 = vpop.permute.xlu0 %71
    %75 = vset.pattern.permute.xlu0 0
    %76 = vperm.xlu0 %75, %v38
    %v77 = vpop.permute.xlu0 %76
    %v80 = vperm.slane %v30, 0
    %v82 = vmul.f32 %v42, %v80
    %v83 = vmul.f32 %v47, %v80
    %v84 = vmul.f32 %v52, %v80
    %v85 = vmul.f32 %v57, %v80
    %v86 = vmul.f32 %v62, %v80
    %v87 = vmul.f32 %v67, %v80
    %v88 = vmul.f32 %v72, %v80
    %v89 = vmul.f32 %v77, %v80
    %v90 = vld [vmem:[%s2] sm:$0xff]
    %v91 = vld [vmem:[%s2 + $0x8] sm:$0xff]
    %v92 = vld [vmem:[%s2 + $0x10] sm:$0xff]
    %v93 = vld [vmem:[%s2 + $0x18] sm:$0xff]
    %v94 = vld [vmem:[%s2 + $0x20] sm:$0xff]
    %v95 = vld [vmem:[%s2 + $0x28] sm:$0xff]
    %v96 = vld [vmem:[%s2 + $0x30] sm:$0xff]
    %v97 = vld [vmem:[%s2 + $0x38] sm:$0xff]
    %99 = vset.pattern.permute.xlu0 0
    %100 = vperm.xlu0 %99, %v90
    %v101 = vpop.permute.xlu0 %100
    %104 = vset.pattern.permute.xlu0 0
    %105 = vperm.xlu0 %104, %v91
    %v106 = vpop.permute.xlu0 %105
    %109 = vset.pattern.permute.xlu0 0
    %110 = vperm.xlu0 %109, %v92
    %v111 = vpop.permute.xlu0 %110
    %114 = vset.pattern.permute.xlu0 0
    %115 = vperm.xlu0 %114, %v93
    %v116 = vpop.permute.xlu0 %115
    %119 = vset.pattern.permute.xlu0 0
    %120 = vperm.xlu0 %119, %v94
    %v121 = vpop.permute.xlu0 %120
    %124 = vset.pattern.permute.xlu0 0
    %125 = vperm.xlu0 %124, %v95
    %v126 = vpop.permute.xlu0 %125
    %129 = vset.pattern.permute.xlu0 0
    %130 = vperm.xlu0 %129, %v96
    %v131 = vpop.permute.xlu0 %130
    %134 = vset.pattern.permute.xlu0 0
    %135 = vperm.xlu0 %134, %v97
    %v136 = vpop.permute.xlu0 %135
    %v138 = vadd.f32 %v82, %v101
    %v139 = vadd.f32 %v83, %v106
    %v140 = vadd.f32 %v84, %v111
    %v141 = vadd.f32 %v85, %v116
    %v142 = vadd.f32 %v86, %v121
    %v143 = vadd.f32 %v87, %v126
    %v144 = vadd.f32 %v88, %v131
    %v145 = vadd.f32 %v89, %v136
    %v146 = vtanh.pop %v138
    %v147 = vtanh.pop %v139
    %v148 = vtanh.pop %v140
    %v149 = vtanh.pop %v141
    %v150 = vtanh.pop %v142
    %v151 = vtanh.pop %v143
    %v152 = vtanh.pop %v144
    %v153 = vtanh.pop %v145
    %v154 = vld [vmem:[%s3] sm:$0xf]
    %v155 = vld [vmem:[%s3 + $0x4] sm:$0xf]
    %v156 = vld [vmem:[%s3 + $0x8] sm:$0xf]
    %v157 = vld [vmem:[%s3 + $0xc] sm:$0xf]
    %v158 = vld [vmem:[%s3 + $0x10] sm:$0xf]
    %v159 = vld [vmem:[%s3 + $0x14] sm:$0xf]
    %v160 = vld [vmem:[%s3 + $0x18] sm:$0xf]
    %v161 = vld [vmem:[%s3 + $0x1c] sm:$0xf]
    %v162 = vpack.c.bf16 %v147, %v146
    %v163 = vpack.c.bf16 %v149, %v148
    %v164 = vpack.c.bf16 %v151, %v150
    %v165 = vpack.c.bf16 %v153, %v152
    %v166 = vld [vmem:[%s4] sm:$0xff]
    %v167 = vld [vmem:[%s4 + $0x8] sm:$0xff]
    %v168 = vld [vmem:[%s4 + $0x10] sm:$0xff]
    %v169 = vld [vmem:[%s4 + $0x18] sm:$0xff]
    %v170 = vld [vmem:[%s4 + $0x20] sm:$0xff]
    %v171 = vld [vmem:[%s4 + $0x28] sm:$0xff]
    %v172 = vld [vmem:[%s4 + $0x30] sm:$0xff]
    %v173 = vld [vmem:[%s4 + $0x38] sm:$0xff]
    %175 = vset.pattern.permute.xlu0 0
    %176 = vperm.xlu0 %175, %v166
    %v177 = vpop.permute.xlu0 %176
    %180 = vset.pattern.permute.xlu0 0
    %181 = vperm.xlu0 %180, %v167
    %v182 = vpop.permute.xlu0 %181
    %185 = vset.pattern.permute.xlu0 0
    %186 = vperm.xlu0 %185, %v168
    %v187 = vpop.permute.xlu0 %186
    %190 = vset.pattern.permute.xlu0 0
    %191 = vperm.xlu0 %190, %v169
    %v192 = vpop.permute.xlu0 %191
    %195 = vset.pattern.permute.xlu0 0
    %196 = vperm.xlu0 %195, %v170
    %v197 = vpop.permute.xlu0 %196
    %200 = vset.pattern.permute.xlu0 0
    %201 = vperm.xlu0 %200, %v171
    %v202 = vpop.permute.xlu0 %201
    %205 = vset.pattern.permute.xlu0 0
    %206 = vperm.xlu0 %205, %v172
    %v207 = vpop.permute.xlu0 %206
    %210 = vset.pattern.permute.xlu0 0
    %211 = vperm.xlu0 %210, %v173
    %v212 = vpop.permute.xlu0 %211
    %v222 = vunpack.c.l.b16 %v154
    %v223 = vunpack.c.l.b16 %v155
    %v224 = vunpack.c.l.b16 %v156
    %v225 = vunpack.c.l.b16 %v157
    %v226 = vunpack.c.l.b16 %v158
    %v227 = vunpack.c.l.b16 %v159
    %v228 = vunpack.c.l.b16 %v160
    %v229 = vunpack.c.l.b16 %v161
    %v230 = vpack.c.b16 %v223, %v222
    %v231 = vpack.c.b16 %v225, %v224
    %v232 = vpack.c.b16 %v227, %v226
    %v233 = vpack.c.b16 %v229, %v228
    %vm234 = vcmask 523264
    %v236 = vsel %vm234, %v230, 0
    %v239 = vsel %vm234, %v231, 0
    %v242 = vsel %vm234, %v232, 0
    %v245 = vsel %vm234, %v233, 0
    %247 = vmatpush.bf16.msra.mxu0 0
    %248 = vmatpush.bf16.msra.mxu0 0
    %249 = vmatpush.bf16.msra.mxu0 0
    %250 = vmatpush.bf16.msra.mxu0 0
    %251 = vmatpush.bf16.msra.mxu0 %v165
    %252 = vmatpush.bf16.msra.mxu0 %v164
    %253 = vmatpush.bf16.msra.mxu0 %v163
    %254 = vmatpush.bf16.msra.mxu0 %v162
    %255 = vmatmul.bf16.gmra.mxu0 %v236
    %v256 = vpop.f32.mrf.mxu0
    %v257 = vadd.f32 %v177, %v256
    %v258 = vpop.f32.mrf.mxu0
    %v259 = vadd.f32 %v182, %v258
    %260 = vmatmul.bf16.gmra.mxu0 %v239
    %v261 = vpop.f32.mrf.mxu0
    %v262 = vadd.f32 %v187, %v261
    %v263 = vpop.f32.mrf.mxu0
    %v264 = vadd.f32 %v192, %v263
    %265 = vmatmul.bf16.gmra.mxu0 %v242
    %v266 = vpop.f32.mrf.mxu0
    %v267 = vadd.f32 %v197, %v266
    %v268 = vpop.f32.mrf.mxu0
    %v269 = vadd.f32 %v202, %v268
    %270 = vmatmul.bf16.gmra.mxu0 %v245
    %v271 = vpop.f32.mrf.mxu0
    %v272 = vadd.f32 %v207, %v271
    %v273 = vpop.f32.mrf.mxu0
    %v274 = vadd.f32 %v212, %v273
    %275 = vdwg.mxu0
    %v276 = vtanh.pop %v257
    %v277 = vtanh.pop %v259
    %v278 = vtanh.pop %v262
    %v279 = vtanh.pop %v264
    %v280 = vtanh.pop %v267
    %v281 = vtanh.pop %v269
    %v282 = vtanh.pop %v272
    %v283 = vtanh.pop %v274
    %v284 = vld [vmem:[%s5] sm:$0xff]
    %v285 = vld [vmem:[%s5 + $0x8] sm:$0xff]
    %v286 = vld [vmem:[%s5 + $0x10] sm:$0xff]
    %v287 = vld [vmem:[%s5 + $0x18] sm:$0xff]
    %v288 = vld [vmem:[%s5 + $0x20] sm:$0xff]
    %v289 = vld [vmem:[%s5 + $0x28] sm:$0xff]
    %v290 = vld [vmem:[%s5 + $0x30] sm:$0xff]
    %v291 = vld [vmem:[%s5 + $0x38] sm:$0xff]
    %293 = vset.pattern.permute.xlu0 0
    %294 = vperm.xlu0 %293, %v284
    %v295 = vpop.permute.xlu0 %294
    %298 = vset.pattern.permute.xlu0 0
    %299 = vperm.xlu0 %298, %v285
    %v300 = vpop.permute.xlu0 %299
    %303 = vset.pattern.permute.xlu0 0
    %304 = vperm.xlu0 %303, %v286
    %v305 = vpop.permute.xlu0 %304
    %308 = vset.pattern.permute.xlu0 0
    %309 = vperm.xlu0 %308, %v287
    %v310 = vpop.permute.xlu0 %309
    %313 = vset.pattern.permute.xlu0 0
    %314 = vperm.xlu0 %313, %v288
    %v315 = vpop.permute.xlu0 %314
    %318 = vset.pattern.permute.xlu0 0
    %319 = vperm.xlu0 %318, %v289
    %v320 = vpop.permute.xlu0 %319
    %323 = vset.pattern.permute.xlu0 0
    %324 = vperm.xlu0 %323, %v290
    %v325 = vpop.permute.xlu0 %324
    %328 = vset.pattern.permute.xlu0 0
    %329 = vperm.xlu0 %328, %v291
    %v330 = vpop.permute.xlu0 %329
    %v332 = vmul.f32 %v295, %v276
    %v333 = vmul.f32 %v300, %v277
    %v334 = vmul.f32 %v305, %v278
    %v335 = vmul.f32 %v310, %v279
    %v336 = vmul.f32 %v315, %v280
    %v337 = vmul.f32 %v320, %v281
    %v338 = vmul.f32 %v325, %v282
    %v339 = vmul.f32 %v330, %v283
    %v340 = vadd.f32 %v332, %v333
    %v341 = vadd.f32 %v340, %v334
    %v342 = vadd.f32 %v341, %v335
    %v343 = vadd.f32 %v342, %v336
    %v344 = vadd.f32 %v343, %v337
    %v345 = vadd.f32 %v344, %v338
    %v346 = vadd.f32 %v345, %v339
    %v347 = vrot.slane %v346, 4
    %v348 = vadd.f32 %v346, %v347
    %v349 = vrot.slane %v348, 2
    %v350 = vadd.f32 %v348, %v349
    %v351 = vrot.slane %v350, 1
    %v352 = vadd.f32 %v350, %v351
    %v353 = vld [vmem:[#allocation2] sm:$0x1]
    %355 = vset.pattern.permute.xlu0 0
    %356 = vperm.xlu0 %355, %v353
    %v357 = vpop.permute.xlu0 %356
    %v359 = vperm.slane %v357, 0
    %v360 = vadd.f32 %v352, %v359
    %361 = vst [vmem:[#allocation3] sm:$0x1] %v360
    // Predicated region
    $region30: #{tpu_custom_call.1} parent=1 // pred_check
      _
    $region31: #{tpu_custom_call.1} parent=1 // pred_check_branch
      %363 = sbr.rel (0) target = $region33
    $region32: #{tpu_custom_call.1} parent=1 // pred_region
      %365 = vsyncadd [#allocation4], 0
      %s367 = sshll.u32 [#allocation3], 4
      %s368 = int_to_ptr.vmem [resolvable:$true] %s367
      %s369 = sshll.u32 %s7, 4
      %s370 = int_to_ptr.hbm [resolvable:$true] %s369
      %372 = dma.vmem_to_hbm [thread:$0]  %s368, 16, %s370, [#allocation4]
    $region33: #{tpu_custom_call.1} parent=1 // pred_fallthru
      _
    // Predicated region
    $region34: #{tpu_custom_call.1} parent=1 // pred_check
      _
    $region35: #{tpu_custom_call.1} parent=1 // pred_check_branch
      %374 = sbr.rel (0) target = $region37
    $region36: #{tpu_custom_call.1} parent=1 // pred_region
      %376 = dma.done [#allocation4], 16
    $region37: #{tpu_custom_call.1} parent=1 // pred_fallthru
      _
    %377 = vsyncpa [#allocation4], 1

</llo_original>
